<compile_context>
chip_gen: v5e
topology: v5e:2x2
jax: 0.10.0
libtpu: 0.0.40
codegen_flags: <defaults>
</compile_context>

<pallas_src>
import functools

import jax
import jax.numpy as jnp
from jax.experimental import pallas as pl
from jax.experimental.pallas import tpu as pltpu


def _round_up(x, m):
    return ((x + m - 1) // m) * m


def _k_tiling(k_raw, tile_k):
    """Return (k_pad, tk): K padded to a whole number of tk-wide tiles.

    Uses a single K block (no grid-K accumulation at all) whenever the
    128-padded K fits in tile_k.
    """
    k128 = _round_up(k_raw, 128)
    if k128 <= tile_k:
        return k128, k128
    return _round_up(k128, tile_k), tile_k


def _n_tiling(n_raw, tile_n, full_n_cap):
    """Return (n_pad, tn): whole-N tile when hidden fits (lane-dense stores,
    each x tile read from HBM exactly once)."""
    n128 = _round_up(n_raw, 128)
    if n128 <= full_n_cap:
        return n128, n128
    return _round_up(n128, tile_n), tile_n


def _linear_relu_kernel_f32(x_ref, w_ref, b_ref, o_ref):
    """f32 output: accumulate directly into the K-resident output tile."""
    k = pl.program_id(2)

    @pl.when(k == 0)
    def _():
        o_ref[...] = jnp.broadcast_to(b_ref[...], o_ref.shape)

    o_ref[...] += jnp.dot(x_ref[...], w_ref[...],
                          preferred_element_type=jnp.float32)

    @pl.when(k == pl.num_programs(2) - 1)
    def _():
        o_ref[...] = jnp.maximum(o_ref[...], 0.0)


def _linear_relu_kernel_acc(x_ref, w_ref, b_ref, o_ref, acc_ref):
    """Non-f32 output: f32 VMEM accumulator, ReLU + cast in the epilogue."""
    k = pl.program_id(2)

    @pl.when(k == 0)
    def _():
        acc_ref[...] = jnp.broadcast_to(b_ref[...], acc_ref.shape)

    acc_ref[...] += jnp.dot(x_ref[...], w_ref[...],
                            preferred_element_type=jnp.float32)

    @pl.when(k == pl.num_programs(2) - 1)
    def _():
        o_ref[...] = jnp.maximum(acc_ref[...], 0.0).astype(o_ref.dtype)


def prepare_params(weight_t, bias, *, tile_n=512, tile_k=1024, full_n_cap=1024):
    """Zero-pad Linear params to lane-aligned tile shapes ONCE, at load time.

    Returns (weight_padded (k_pad, n_pad), bias_padded (1, n_pad) f32) so the
    jitted forward does not re-pad the weight every call.
    """
    k_raw, n_raw = weight_t.shape
    k_pad, _ = _k_tiling(k_raw, tile_k)
    n_pad, _ = _n_tiling(n_raw, tile_n, full_n_cap)
    w = weight_t
    if w.shape != (k_pad, n_pad):
        w = jnp.pad(w, ((0, k_pad - k_raw), (0, n_pad - n_raw)))
    b2d = bias.astype(jnp.float32).reshape(1, -1)
    if b2d.shape[1] != n_pad:
        b2d = jnp.pad(b2d, ((0, 0), (0, n_pad - b2d.shape[1])))
    return w, b2d


@functools.partial(
    jax.jit,
    static_argnames=("hidden_dim", "tile_m", "tile_n", "tile_k", "full_n_cap"),
)
def self_information_network(
    x, weight_t, bias, *, hidden_dim=None,
    tile_m=512, tile_n=512, tile_k=1024, full_n_cap=1024,
):
    """relu(x @ weight_t + bias)  -- equivalent to nn.Linear + ReLU.

    x:        (..., input_dim)
    weight_t: (input_dim[, padded], hidden[, padded])   (PyTorch weight.T,
              optionally pre-padded via prepare_params)
    bias:     (hidden,) or pre-padded (1, n_pad) f32
    hidden_dim: true output width (needed when weight_t is pre-padded).
    """
    orig_shape = x.shape
    in_dim = orig_shape[-1]
    k_raw, n_raw = weight_t.shape
    hidden = int(hidden_dim) if hidden_dim is not None else n_raw
    assert in_dim <= k_raw, "x feature dim exceeds weight input dim"

    x2d = x.reshape(-1, in_dim)
    M = x2d.shape[0]
    out_dtype = x.dtype

    k_pad, tk = _k_tiling(k_raw, tile_k)
    n_pad, tn = _n_tiling(n_raw, tile_n, full_n_cap)

    # Pad / cast params only if not already prepared (trace-time check -> no
    # ops emitted when prepare_params was used).
    w = weight_t
    if w.dtype != x.dtype:
        w = w.astype(x.dtype)  # deliberate MXU input precision
    if w.shape != (k_pad, n_pad):
        w = jnp.pad(w, ((0, k_pad - k_raw), (0, n_pad - n_raw)))
    b2d = bias.astype(jnp.float32).reshape(1, -1)
    if b2d.shape[1] != n_pad:
        b2d = jnp.pad(b2d, ((0, 0), (0, n_pad - b2d.shape[1])))

    # Zero-pad x along K only (padded columns meet zero weight rows).  M stays
    # ragged: the grid uses cdiv and the last row-block's out-of-bounds rows
    # are never written back and never touch valid rows.
    if in_dim != k_pad:
        x2d = jnp.pad(x2d, ((0, 0), (0, k_pad - in_dim)))

    # Row tiling: multiples of 256 (fills the 256x256 MXU on v6e/v7x); tiny-M
    # problems use a single sublane-aligned block instead of a padded tile.
    sub_align = {4: 8, 2: 16, 1: 32}.get(jnp.dtype(x.dtype).itemsize, 8)
    if M <= 256:
        tm = _round_up(M, sub_align)
    else:
        tm = min(tile_m, _round_up(M, 256))
    grid_m = pl.cdiv(M, tm)
    grid_n = n_pad // tn
    # v7x megacore: expose >=2 parallel grid steps when there is enough work.
    if grid_m * grid_n == 1 and tm >= 512:
        tm //= 2
        grid_m = pl.cdiv(M, tm)
    grid_k = k_pad // tk
    grid = (grid_m, grid_n, grid_k)

    use_direct = jnp.dtype(out_dtype) == jnp.float32
    kernel = _linear_relu_kernel_f32 if use_direct else _linear_relu_kernel_acc
    scratch = [] if use_direct else [pltpu.VMEM((tm, tn), jnp.float32)]

    itemsize = jnp.dtype(x.dtype).itemsize
    est = (2 * (tm * tk + tk * tn + tm * tn) * itemsize
           + (0 if use_direct else tm * tn * 4) + (2 << 20))
    vmem_limit = max(32 << 20, min(int(est * 1.25), 64 << 20))

    out = pl.pallas_call(
        kernel,
        out_shape=jax.ShapeDtypeStruct((M, n_pad), out_dtype),
        grid_spec=pltpu.PrefetchScalarGridSpec(
            num_scalar_prefetch=0,
            grid=grid,
            in_specs=[
                pl.BlockSpec((tm, tk), lambda i, j, k: (i, k)),   # x tile
                pl.BlockSpec((tk, tn), lambda i, j, k: (k, j)),   # weight tile
                pl.BlockSpec((1, tn), lambda i, j, k: (0, j)),    # bias slice
            ],
            out_specs=pl.BlockSpec((tm, tn), lambda i, j, k: (i, j)),
            scratch_shapes=scratch,
        ),
        compiler_params=pltpu.CompilerParams(
            dimension_semantics=("parallel", "parallel", "arbitrary"),
            vmem_limit_bytes=vmem_limit,
        ),
    )(x2d, w, b2d)

    out = out[:, :hidden]
    return out.reshape(*orig_shape[:-1], hidden)


def init_params(key, input_dim, hidden_dim, dtype=jnp.float32):
    """Deterministic init mirroring nn.Linear default: U(-1/sqrt(in), 1/sqrt(in)).
    Weight is returned transposed vs PyTorch, i.e. (input_dim, hidden_dim)."""
    kw, kb = jax.random.split(key)
    bound = 1.0 / (input_dim ** 0.5)
    weight_t = jax.random.uniform(
        kw, (input_dim, hidden_dim), dtype, minval=-bound, maxval=bound
    )
    bias = jax.random.uniform(
        kb, (hidden_dim,), dtype, minval=-bound, maxval=bound
    )
    return weight_t, bias


if __name__ == "__main__":
    key = jax.random.PRNGKey(0)
    k_x, k_p = jax.random.split(key)

    batch, seq, input_dim, hidden_dim = 2, 8, 16, 32
    x = jax.random.normal(k_x, (batch, seq, input_dim), dtype=jnp.float32)
    weight_t, bias = init_params(k_p, input_dim, hidden_dim)

    # Pad parameters once at load time so the jitted forward does no per-call
    # weight padding / extra HBM round trips.
    w_padded, b_padded = prepare_params(weight_t, bias)

    out = self_information_network(x, w_padded, b_padded, hidden_dim=hidden_dim)
    out = jax.block_until_ready(out)

    # Sanity check against plain JAX reference (unpadded params).
    ref = jnp.maximum(jnp.einsum("bsi,ih->bsh", x, weight_t) + bias, 0.0)
    assert out.shape == (batch, seq, hidden_dim)
    assert jnp.allclose(out, ref, atol=1e-5, rtol=1e-5)

    print("KERNEL_OK")
</pallas_src>

<mosaic_0001>
module attributes {stable_mosaic.version = 11 : i64} {
  func.func @_linear_relu_kernel_f32(%arg0: i32, %arg1: i32, %arg2: i32, %arg3: memref<16x128xf32, #tpu.memory_space<vmem>>, %arg4: memref<128x128xf32, #tpu.memory_space<vmem>>, %arg5: memref<1x128xf32, #tpu.memory_space<vmem>>, %arg6: memref<16x128xf32, #tpu.memory_space<vmem>>) attributes {dimension_semantics = [#tpu.dimension_semantics<parallel>, #tpu.dimension_semantics<parallel>, #tpu.dimension_semantics<arbitrary>], iteration_bounds = array<i64: 1, 1, 1>, scalar_prefetch = 0 : i64, scratch_operands = 0 : i64, tpu.core_type = #tpu.core_type<tc>, window_params = [{transform_indices = @transform_0, window_bounds = array<i64: 16, 128>}, {transform_indices = @transform_1, window_bounds = array<i64: 128, 128>}, {transform_indices = @transform_2, window_bounds = array<i64: 1, 128>}, {transform_indices = @transform_3, window_bounds = array<i64: 16, 128>}]} {
    %c0_i32 = arith.constant 0 : i32
    %0 = arith.cmpi eq, %arg2, %c0_i32 : i32
    %1 = arith.extui %0 : i1 to i32
    %c0_i32_0 = arith.constant 0 : i32
    %2 = arith.cmpi ne, %1, %c0_i32_0 : i32
    scf.if %2 {
      %c0_10 = arith.constant 0 : index
      %c0_11 = arith.constant 0 : index
      %12 = vector.load %arg5[%c0_10, %c0_11] : memref<1x128xf32, #tpu.memory_space<vmem>>, vector<1x128xf32>
      %13 = vector.shape_cast %12 : vector<1x128xf32> to vector<1x128xf32>
      %14 = vector.broadcast %13 : vector<1x128xf32> to vector<16x128xf32>
      %c0_12 = arith.constant 0 : index
      %c0_13 = arith.constant 0 : index
      %15 = vector.load %arg6[%c0_12, %c0_13] : memref<16x128xf32, #tpu.memory_space<vmem>>, vector<16x128xf32>
      tpu.vector_store %arg6[%c0_12, %c0_13], %14 {strides = array<i32>} : memref<16x128xf32, #tpu.memory_space<vmem>>, vector<16x128xf32>,
    } else {
    }
    %c0 = arith.constant 0 : index
    %c0_1 = arith.constant 0 : index
    %3 = vector.load %arg6[%c0, %c0_1] : memref<16x128xf32, #tpu.memory_space<vmem>>, vector<16x128xf32>
    %c0_2 = arith.constant 0 : index
    %c0_3 = arith.constant 0 : index
    %4 = vector.load %arg3[%c0_2, %c0_3] : memref<16x128xf32, #tpu.memory_space<vmem>>, vector<16x128xf32>
    %c0_4 = arith.constant 0 : index
    %c0_5 = arith.constant 0 : index
    %5 = vector.load %arg4[%c0_4, %c0_5] : memref<128x128xf32, #tpu.memory_space<vmem>>, vector<128x128xf32>
    %cst = arith.constant dense<0.000000e+00> : vector<16x128xf32>
    %6 = tpu.matmul %4, %5, %cst {dimension_numbers = #tpu.dot_dimension_numbers<[1], [0], [0], [1], [0, 0, 1, 1], [], []>} : vector<16x128xf32>, vector<128x128xf32>, vector<16x128xf32> -> vector<16x128xf32>
    %7 = arith.addf %3, %6 : vector<16x128xf32>
    %c0_6 = arith.constant 0 : index
    %c0_7 = arith.constant 0 : index
    %8 = vector.load %arg6[%c0_6, %c0_7] : memref<16x128xf32, #tpu.memory_space<vmem>>, vector<16x128xf32>
    tpu.vector_store %arg6[%c0_6, %c0_7], %7 {strides = array<i32>} : memref<16x128xf32, #tpu.memory_space<vmem>>, vector<16x128xf32>,
    %c0_i32_8 = arith.constant 0 : i32
    %9 = arith.cmpi eq, %arg2, %c0_i32_8 : i32
    %10 = arith.extui %9 : i1 to i32
    %c0_i32_9 = arith.constant 0 : i32
    %11 = arith.cmpi ne, %10, %c0_i32_9 : i32
    scf.if %11 {
      %c0_10 = arith.constant 0 : index
      %c0_11 = arith.constant 0 : index
      %12 = vector.load %arg6[%c0_10, %c0_11] : memref<16x128xf32, #tpu.memory_space<vmem>>, vector<16x128xf32>
      %cst_12 = arith.constant 0.000000e+00 : f32
      %13 = vector.broadcast %cst_12 : f32 to vector<16x128xf32>
      %14 = arith.maximumf %12, %13 : vector<16x128xf32>
      %c0_13 = arith.constant 0 : index
      %c0_14 = arith.constant 0 : index
      %15 = vector.load %arg6[%c0_13, %c0_14] : memref<16x128xf32, #tpu.memory_space<vmem>>, vector<16x128xf32>
      tpu.vector_store %arg6[%c0_13, %c0_14], %14 {strides = array<i32>} : memref<16x128xf32, #tpu.memory_space<vmem>>, vector<16x128xf32>,
    } else {
    }
    return
  }
  func.func @transform_0(%arg0: i32, %arg1: i32, %arg2: i32) -> (i32, i32) {
    %c0_i32 = arith.constant 0 : i32
    return %arg0, %arg2 : i32, i32
  }
  func.func @transform_1(%arg0: i32, %arg1: i32, %arg2: i32) -> (i32, i32) {
    %c0_i32 = arith.constant 0 : i32
    return %arg2, %arg1 : i32, i32
  }
  func.func @transform_2(%arg0: i32, %arg1: i32, %arg2: i32) -> (i32, i32) {
    %c0_i32 = arith.constant 0 : i32
    %c0_i32_0 = arith.constant 0 : i32
    return %c0_i32, %arg1 : i32, i32
  }
  func.func @transform_3(%arg0: i32, %arg1: i32, %arg2: i32) -> (i32, i32) {
    %c0_i32 = arith.constant 0 : i32
    return %arg0, %arg1 : i32, i32
  }
}

</mosaic_0001>

<llo_original>
// kernel: self_information_network.1
$region0: #{self_information_network.1}
  #allocation0 [shape = 'u32[]', space=smem, size = 0x4, offset = 0x4, fixed_abs, tag = 'smem constant byte address 0x4 - core index']
  #allocation1 [shape = 'u32[72,128]{1,0:T(1,128)}', space=vmem, size = 0x9000, scoped, tag = 'internal scratch']
  %s0 = inlined_call_operand.vmem [shape: f32[16,128], index: 0, kind: input, shape index: {}]
  %s1 = inlined_call_operand.hbm [shape: f32[128,128], index: 1, kind: input, shape index: {}]
  %s2 = inlined_call_operand.vmem [shape: f32[1,128], index: 2, kind: input, shape index: {}]
  %s3 = inlined_call_operand.vmem [shape: f32[16,128], index: 3, kind: output, shape index: {}]
  %s4 = sld [smem:[#allocation0]]
  $region34: #{self_information_network.1} parent=0
    _
  %s6 = ssub.s32 1, %s4
  %s7 = scalar_select 0, %s6, %s4
  $region1: #{self_information_network.1} parent=0
    #allocation2 [shape = 'u8[65536]{0}', space=vmem, size = 0x10000, scoped, tag = 'input window, operand 1, single buffered']
    #allocation3 [shape = 's32[1]{0}', space=sflag, size = 0x4, scoped, tag = 'scoped memory for self_information_network.1']
    %8 = vsyncpa [#allocation3], 0
    // Predicated region
    $region2: #{self_information_network.1} parent=1 // pred_check
      _
    $region3: #{self_information_network.1} parent=1 // pred_check_branch
      %10 = sbr.rel (0) target = $region5
    $region4: #{self_information_network.1} parent=1 // pred_region
      _
    $region5: #{self_information_network.1} parent=1 // pred_fallthru
      _
    // Predicated region
    $region6: #{self_information_network.1} parent=1 // pred_check
      _
    $region7: #{self_information_network.1} parent=1 // pred_check_branch
      %12 = sbr.rel (0) target = $region9
    $region8: #{self_information_network.1} parent=1 // pred_region
      %14 = vsyncadd [#allocation3], 0
      %s15 = sshll.u32 %s1, 4
      %s16 = int_to_ptr.hbm [resolvable:$true] %s15
      %s17 = sshll.u32 [#allocation2], 4
      %s18 = int_to_ptr.vmem [resolvable:$true] %s17
      %23 = dma.hbm_to_vmem [thread:$0]  %s16, 2048, %s18, [#allocation3], 128, 128, 8
    $region9: #{self_information_network.1} parent=1 // pred_fallthru
      _
    // Predicated region
    $region10: #{self_information_network.1} parent=1 // pred_check
      _
    $region11: #{self_information_network.1} parent=1 // pred_check_branch
      %25 = sbr.rel (0) target = $region13
    $region12: #{self_information_network.1} parent=1 // pred_region
      _
    $region13: #{self_information_network.1} parent=1 // pred_fallthru
      _
    // Predicated region
    $region14: #{self_information_network.1} parent=1 // pred_check
      _
    $region15: #{self_information_network.1} parent=1 // pred_check_branch
      %27 = sbr.rel (0) target = $region17
    $region16: #{self_information_network.1} parent=1 // pred_region
      %29 = dma.done [#allocation3], 2048
    $region17: #{self_information_network.1} parent=1 // pred_fallthru
      _
    %p30 = scmp.eq.s32.totalorder 0, 0
    // Predicated region
    $region18: #{self_information_network.1} parent=1 // pred_check
      %p31 = pneg %p30
    $region19: #{self_information_network.1} parent=1 // pred_check_branch
      %33 = sbr.rel (%p31) target = $region21
    $region20: #{self_information_network.1} parent=1 // pred_region
      %v34 = vld [vmem:[%s2] sm:$0x1]
      %v36 = vperm.slane %v34, 0
      %38 = vst [vmem:[%s3] sm:$0xff] %v36
      %39 = vst [vmem:[%s3 + $0x8] sm:$0xff] %v36
    $region21: #{self_information_network.1} parent=1 // pred_fallthru
      _
    %v40 = vld [vmem:[%s3] sm:$0xff]
    %v41 = vld [vmem:[%s3 + $0x8] sm:$0xff]
    %v42 = vld [vmem:[%s0] sm:$0xff]
    %v43 = vld [vmem:[%s0 + $0x8] sm:$0xff]
    %v44 = vld [vmem:[#allocation2] sm:$0xff]
    %v45 = vld [vmem:[#allocation2 + $0x8] sm:$0xff]
    %v46 = vld [vmem:[#allocation2 + $0x10] sm:$0xff]
    %v47 = vld [vmem:[#allocation2 + $0x18] sm:$0xff]
    %v48 = vld [vmem:[#allocation2 + $0x20] sm:$0xff]
    %v49 = vld [vmem:[#allocation2 + $0x28] sm:$0xff]
    %v50 = vld [vmem:[#allocation2 + $0x30] sm:$0xff]
    %v51 = vld [vmem:[#allocation2 + $0x38] sm:$0xff]
    %v52 = vld [vmem:[#allocation2 + $0x40] sm:$0xff]
    %v53 = vld [vmem:[#allocation2 + $0x48] sm:$0xff]
    %v54 = vld [vmem:[#allocation2 + $0x50] sm:$0xff]
    %v55 = vld [vmem:[#allocation2 + $0x58] sm:$0xff]
    %v56 = vld [vmem:[#allocation2 + $0x60] sm:$0xff]
    %v57 = vld [vmem:[#allocation2 + $0x68] sm:$0xff]
    %v58 = vld [vmem:[#allocation2 + $0x70] sm:$0xff]
    %v59 = vld [vmem:[#allocation2 + $0x78] sm:$0xff]
    %60 = vmatpush.msra.mxu0 %v59
    %61 = vmatpush.msra.mxu0 %v58
    %62 = vmatpush.msra.mxu0 %v57
    %63 = vmatpush.msra.mxu0 %v56
    %64 = vmatpush.msra.mxu0 %v55
    %65 = vmatpush.msra.mxu0 %v54
    %66 = vmatpush.msra.mxu0 %v53
    %67 = vmatpush.msra.mxu0 %v52
    %68 = vmatpush.msra.mxu0 %v51
    %69 = vmatpush.msra.mxu0 %v50
    %70 = vmatpush.msra.mxu0 %v49
    %71 = vmatpush.msra.mxu0 %v48
    %72 = vmatpush.msra.mxu0 %v47
    %73 = vmatpush.msra.mxu0 %v46
    %74 = vmatpush.msra.mxu0 %v45
    %75 = vmatpush.msra.mxu0 %v44
    %76 = vmatmul.f32.gmra.mxu0 %v42
    %v77 = vpop.f32.mrf.mxu0
    %v78 = vadd.f32 0.0, %v77
    %79 = vmatmul.f32.gmra.mxu0 %v43
    %v80 = vpop.f32.mrf.mxu0
    %v81 = vadd.f32 0.0, %v80
    %82 = vdwg.mxu0
    %v83 = vadd.f32 %v40, %v78
    %v84 = vadd.f32 %v41, %v81
    %85 = vst [vmem:[%s3] sm:$0xff] %v83
    %86 = vst [vmem:[%s3 + $0x8] sm:$0xff] %v84
    // Predicated region
    $region22: #{self_information_network.1} parent=1 // pred_check
      %p87 = pneg %p30
    $region23: #{self_information_network.1} parent=1 // pred_check_branch
      %89 = sbr.rel (%p87) target = $region25
    $region24: #{self_information_network.1} parent=1 // pred_region
      %v90 = vld [vmem:[%s3] sm:$0xff]
      %v91 = vld [vmem:[%s3 + $0x8] sm:$0xff]
      %v92 = vmax.f32 %v90, 0.0
      %v93 = vmax.f32 %v91, 0.0
      %94 = vst [vmem:[%s3] sm:$0xff] %v92
      %95 = vst [vmem:[%s3 + $0x8] sm:$0xff] %v93
    $region25: #{self_information_network.1} parent=1 // pred_fallthru
      _
    // Predicated region
    $region26: #{self_information_network.1} parent=1 // pred_check
      _
    $region27: #{self_information_network.1} parent=1 // pred_check_branch
      %97 = sbr.rel (0) target = $region29
    $region28: #{self_information_network.1} parent=1 // pred_region
      _
    $region29: #{self_information_network.1} parent=1 // pred_fallthru
      _
    // Predicated region
    $region30: #{self_information_network.1} parent=1 // pred_check
      _
    $region31: #{self_information_network.1} parent=1 // pred_check_branch
      %99 = sbr.rel (0) target = $region33
    $region32: #{self_information_network.1} parent=1 // pred_region
      _
    $region33: #{self_information_network.1} parent=1 // pred_fallthru
      _
    %100 = vsyncpa [#allocation3], 1

</llo_original>
